<compile_context>
chip_gen: v7x
topology: tpu7x:2x2x1
jax: 0.10.0
libtpu: 0.0.40
codegen_flags: <defaults>
</compile_context>

<pallas_src>
import jax
import jax.numpy as jnp
from jax import lax
from jax.experimental import pallas as pl
from jax.experimental.pallas import tpu as pltpu


def _one_hot_encoder_kernel(i_ref, I_ref, w_ref, b_ref, o_ref):
    """i: (1,) int32 in SMEM; I: (time_num, time_num); w: (time_num, embed);
    b: (1, embed); o: (N, T, embed).  All tensors are full-array VMEM blocks."""
    time_num = I_ref.shape[0]
    _, t, _ = o_ref.shape

    # start = i % time_num  (scalar path)
    start = i_ref[0] % time_num

    # Wrap-around row ids (start + t) % time_num, done with a compare/select
    # instead of a vector modulo (valid because T <= time_num, as in torch).
    raw = start + lax.broadcasted_iota(jnp.int32, (t, time_num), 0)
    row_ids = jnp.where(raw >= time_num, raw - time_num, raw)
    col_ids = lax.broadcasted_iota(jnp.int32, (t, time_num), 1)
    sel = (row_ids == col_ids).astype(I_ref.dtype)                # (T, time_num)

    # Exact row gather of the learnable I, expressed as an MXU contraction.
    onehot = jnp.dot(sel, I_ref[...], preferred_element_type=jnp.float32)   # (T, time_num)

    # Linear(time_num -> embed_size): canonical (M,K)x(K,N) MXU feed + fused bias.
    res = jnp.dot(onehot, w_ref[...], preferred_element_type=jnp.float32) + b_ref[...]

    # torch .expand(N, T, time_num) -> broadcast along the leading axis, store once.
    o_ref[...] = jnp.broadcast_to(res.astype(o_ref.dtype), o_ref.shape)


def one_hot_encoder_forward(i, I, w_t, b, N=25, T=12):
    """Forward pass of One_hot_encoder.

    i   : int time index (python int or int32 scalar)
    I   : (time_num, time_num) learnable eye parameter
    w_t : (time_num, embed_size) Linear weight stored PRE-TRANSPOSED
          (== torch onehot_Linear.weight.T, transposed once at init)
    b   : (embed_size,) Linear bias
    returns (N, T, embed_size) float32
    """
    time_num = I.shape[0]
    embed_size = w_t.shape[1]

    i_arr = jnp.asarray(i, jnp.int32).reshape((1,))
    b2 = b.reshape(1, embed_size).astype(jnp.float32)

    flops = 2 * T * time_num * time_num + 2 * T * time_num * embed_size
    bytes_accessed = 4 * (I.size + w_t.size + b.size + N * T * embed_size) + 4

    return pl.pallas_call(
        _one_hot_encoder_kernel,
        out_shape=jax.ShapeDtypeStruct((N, T, embed_size), jnp.float32),
        in_specs=[
            pl.BlockSpec(memory_space=pltpu.MemorySpace.SMEM),   # i (scalar)
            pl.BlockSpec(memory_space=pltpu.MemorySpace.VMEM),   # I
            pl.BlockSpec(memory_space=pltpu.MemorySpace.VMEM),   # w_t
            pl.BlockSpec(memory_space=pltpu.MemorySpace.VMEM),   # b
        ],
        out_specs=pl.BlockSpec(memory_space=pltpu.MemorySpace.VMEM),
        cost_estimate=pl.CostEstimate(
            flops=flops, transcendentals=0, bytes_accessed=bytes_accessed),
    )(i_arr, I.astype(jnp.float32), w_t.astype(jnp.float32), b2)


if __name__ == "__main__":
    embed_size, time_num = 32, 288
    N, T = 25, 12

    key = jax.random.PRNGKey(0)
    kw, kb = jax.random.split(key)
    I = jnp.eye(time_num, dtype=jnp.float32)                               # nn.Parameter eye
    w_t = jax.random.normal(kw, (time_num, embed_size), jnp.float32) * 0.05  # weight.T
    b = jax.random.normal(kb, (embed_size,), jnp.float32) * 0.05

    def ref_forward(i):  # plain-JAX reference of the exact PyTorch semantics
        rows = (i + jnp.arange(T, dtype=jnp.int32)) % time_num
        return jnp.broadcast_to(I[rows] @ w_t + b, (N, T, embed_size))

    # i=283 exercises the wrap-around (torch cat) branch, i=10 the plain branch.
    for i in (283, 10):
        out = jax.block_until_ready(one_hot_encoder_forward(i, I, w_t, b, N=N, T=T))
        ref = ref_forward(i)
        assert out.shape == (N, T, embed_size) and out.dtype == jnp.float32
        err = float(jnp.max(jnp.abs(out - ref)))
        assert jnp.allclose(out, ref, atol=1e-5), err

    print("KERNEL_OK")
</pallas_src>

<mosaic_0001>
module attributes {stable_mosaic.version = 11 : i64} {
  func.func @_one_hot_encoder_kernel(%arg0: memref<1xi32, #tpu.memory_space<smem>>, %arg1: memref<288x288xf32, #tpu.memory_space<vmem>>, %arg2: memref<288x32xf32, #tpu.memory_space<vmem>>, %arg3: memref<1x32xf32, #tpu.memory_space<vmem>>, %arg4: memref<25x12x32xf32, #tpu.memory_space<vmem>>) attributes {dimension_semantics = [], scalar_prefetch = 0 : i64, scratch_operands = 0 : i64, tpu.core_type = #tpu.core_type<tc>} {
    %c0 = arith.constant 0 : index
    %0 = memref.load %arg0[%c0] : memref<1xi32, #tpu.memory_space<smem>>
    %c288_i32 = arith.constant 288 : i32
    %c0_i32 = arith.constant 0 : i32
    %1 = arith.cmpi eq, %c288_i32, %c0_i32 : i32
    %c1_i32 = arith.constant 1 : i32
    %2 = arith.select %1, %c1_i32, %c288_i32 : i32
    %3 = arith.remsi %0, %2 : i32
    %c0_i32_0 = arith.constant 0 : i32
    %4 = arith.cmpi ne, %3, %c0_i32_0 : i32
    %c0_i32_1 = arith.constant 0 : i32
    %5 = arith.cmpi slt, %3, %c0_i32_1 : i32
    %c0_i32_2 = arith.constant 0 : i32
    %6 = arith.cmpi slt, %2, %c0_i32_2 : i32
    %7 = arith.xori %5, %6 : i1
    %8 = arith.andi %7, %4 : i1
    %9 = arith.addi %3, %2 : i32
    %10 = arith.select %8, %9, %3 : i32
    %11 = tpu.iota {dimensions = array<i32: 0>} : vector<12x288xi32>
    %12 = vector.broadcast %10 : i32 to vector<12x288xi32>
    %13 = arith.addi %12, %11 : vector<12x288xi32>
    %c288_i32_3 = arith.constant 288 : i32
    %14 = vector.broadcast %c288_i32_3 : i32 to vector<12x288xi32>
    %15 = arith.cmpi sge, %13, %14 : vector<12x288xi32>
    %c288_i32_4 = arith.constant 288 : i32
    %16 = vector.broadcast %c288_i32_4 : i32 to vector<12x288xi32>
    %17 = arith.subi %13, %16 : vector<12x288xi32>
    %18 = arith.select %15, %17, %13 : vector<12x288xi1>, vector<12x288xi32>
    %19 = tpu.iota {dimensions = array<i32: 1>} : vector<12x288xi32>
    %20 = arith.cmpi eq, %18, %19 : vector<12x288xi32>
    %21 = arith.extui %20 : vector<12x288xi1> to vector<12x288xi32>
    %22 = arith.sitofp %21 : vector<12x288xi32> to vector<12x288xf32>
    %c0_5 = arith.constant 0 : index
    %c0_6 = arith.constant 0 : index
    %23 = vector.load %arg1[%c0_5, %c0_6] : memref<288x288xf32, #tpu.memory_space<vmem>>, vector<288x288xf32>
    %cst = arith.constant dense<0.000000e+00> : vector<12x288xf32>
    %24 = tpu.matmul %22, %23, %cst {dimension_numbers = #tpu.dot_dimension_numbers<[1], [0], [0], [1], [0, 0, 1, 1], [], []>} : vector<12x288xf32>, vector<288x288xf32>, vector<12x288xf32> -> vector<12x288xf32>
    %c0_7 = arith.constant 0 : index
    %c0_8 = arith.constant 0 : index
    %25 = vector.load %arg2[%c0_7, %c0_8] : memref<288x32xf32, #tpu.memory_space<vmem>>, vector<288x32xf32>
    %cst_9 = arith.constant dense<0.000000e+00> : vector<12x32xf32>
    %26 = tpu.matmul %24, %25, %cst_9 {dimension_numbers = #tpu.dot_dimension_numbers<[1], [0], [0], [1], [0, 0, 1, 1], [], []>} : vector<12x288xf32>, vector<288x32xf32>, vector<12x32xf32> -> vector<12x32xf32>
    %c0_10 = arith.constant 0 : index
    %c0_11 = arith.constant 0 : index
    %27 = vector.load %arg3[%c0_10, %c0_11] : memref<1x32xf32, #tpu.memory_space<vmem>>, vector<1x32xf32>
    %28 = vector.broadcast %27 : vector<1x32xf32> to vector<12x32xf32>
    %29 = arith.addf %26, %28 : vector<12x32xf32>
    %30 = vector.shape_cast %29 : vector<12x32xf32> to vector<1x12x32xf32>
    %31 = vector.broadcast %30 : vector<1x12x32xf32> to vector<25x12x32xf32>
    %c0_12 = arith.constant 0 : index
    %c0_13 = arith.constant 0 : index
    %c0_14 = arith.constant 0 : index
    %32 = vector.load %arg4[%c0_12, %c0_13, %c0_14] : memref<25x12x32xf32, #tpu.memory_space<vmem>>, vector<25x12x32xf32>
    tpu.vector_store %arg4[%c0_12, %c0_13, %c0_14], %31 {strides = array<i32>} : memref<25x12x32xf32, #tpu.memory_space<vmem>>, vector<25x12x32xf32>,
    return
  }
}

</mosaic_0001>

<llo_original>
// kernel: tpu_custom_call.1
$region0: #{tpu_custom_call.1}
  #allocation0 [shape = 'u32[]', space=smem, size = 0x4, offset = 0x4, fixed_abs, tag = 'smem constant byte address 0x4 - core index']
  #allocation1 [shape = 'u32[144,128]{1,0:T(1,128)}', space=vmem, size = 0x12000, scoped, tag = 'internal scratch']
  #allocation2 [shape = 's32[1]{0:T(128)S(6)}', space=smem, size = 0x200, scoped, tag = 'scoped memory for tpu_custom_call.1']
  %s0 = inlined_call_operand.<no memory space> [shape: s32[1], index: 0, kind: input, shape index: {}]
  %s1 = inlined_call_operand.hbm [shape: f32[288,288], index: 1, kind: input, shape index: {}]
  %s2 = inlined_call_operand.vmem [shape: f32[288,32], index: 2, kind: input, shape index: {}]
  %s3 = inlined_call_operand.vmem [shape: f32[1,32], index: 3, kind: input, shape index: {}]
  %s4 = inlined_call_operand.vmem [shape: f32[25,12,32], index: 4, kind: output, shape index: {}]
  %s5 = sld [smem:[#allocation0]]
  $region30: #{tpu_custom_call.1} parent=0
    _
  %s7 = ssub.s32 1, %s5
  %s8 = scalar_select 0, %s7, %s5
  %9 = sst [smem:[#allocation2]] %s0
  $region1: #{tpu_custom_call.1} parent=0
    #allocation3 [shape = 'u8[442368]{0}', space=vmem, size = 0x6c000, scoped, tag = 'input window, operand 1, single buffered']
    #allocation4 [shape = 's32[1]{0}', space=sflag, size = 0x4, scoped, tag = 'scoped memory for tpu_custom_call.1']
    %10 = vsyncpa [#allocation4], 0
    // Predicated region
    $region2: #{tpu_custom_call.1} parent=1 // pred_check
      _
    $region3: #{tpu_custom_call.1} parent=1 // pred_check_branch
      %12 = sbr.rel (0) target = $region5
    $region4: #{tpu_custom_call.1} parent=1 // pred_region
      _
    $region5: #{tpu_custom_call.1} parent=1 // pred_fallthru
      _
    // Predicated region
    $region6: #{tpu_custom_call.1} parent=1 // pred_check
      _
    $region7: #{tpu_custom_call.1} parent=1 // pred_check_branch
      %14 = sbr.rel (0) target = $region9
    $region8: #{tpu_custom_call.1} parent=1 // pred_region
      %s16 = ssub.s32 13824, 13824
      %17 = vsyncadd [#allocation4], %s16
      %s18 = sshll.u32 [#allocation3], 4
      %s19 = int_to_ptr.vmem [resolvable:$true] %s18
      %24 = dma.hbm_to_vmem [thread:$0]  %s1, 13824, %s19, [#allocation4], 384, 384, 24
    $region9: #{tpu_custom_call.1} parent=1 // pred_fallthru
      _
    // Predicated region
    $region10: #{tpu_custom_call.1} parent=1 // pred_check
      _
    $region11: #{tpu_custom_call.1} parent=1 // pred_check_branch
      %26 = sbr.rel (0) target = $region13
    $region12: #{tpu_custom_call.1} parent=1 // pred_region
      _
    $region13: #{tpu_custom_call.1} parent=1 // pred_fallthru
      _
    // Predicated region
    $region14: #{tpu_custom_call.1} parent=1 // pred_check
      _
    $region15: #{tpu_custom_call.1} parent=1 // pred_check_branch
      %28 = sbr.rel (0) target = $region17
    $region16: #{tpu_custom_call.1} parent=1 // pred_region
      _
    $region17: #{tpu_custom_call.1} parent=1 // pred_fallthru
      _
    // Predicated region
    $region18: #{tpu_custom_call.1} parent=1 // pred_check
      _
    $region19: #{tpu_custom_call.1} parent=1 // pred_check_branch
      %30 = sbr.rel (0) target = $region21
    $region20: #{tpu_custom_call.1} parent=1 // pred_region
      %31 = dma.done [#allocation4], 13824
    $region21: #{tpu_custom_call.1} parent=1 // pred_fallthru
      _
    %s32 = sld [smem:[#allocation2]]
    %p33 = scmp.lt.s32.totalorder %s32, 0
    %s34 = ssub.s32 0, %s32
    %s35 = scalar_select %p33, %s34, %s32
    %s36 = sdiv.u32.pop %s35, 288
    %s37 = srem.u32.pop %s35, 288
    %s38 = ssub.s32 0, %s37
    %s39 = scalar_select %p33, %s38, %s37
    %p40 = scmp.ne.s32.totalorder %s39, 0
    %p41 = scmp.lt.s32.totalorder %s39, 0
    %p42 = pnand %p41, %p40
    %p43 = pneg %p42
    %s44 = sadd.s32 %s39, 288
    %s45 = scalar_select %p43, %s44, %s39
    %v46 = vlaneseq
    %v47 = vshrl.u32 %v46, 7
    %v48 = vadd.s32 %v47, 8
    %v49 = vstv %s45
    %v50 = vadd.s32 %v49, %v47
    %v51 = vadd.s32 %v49, %v48
    %vm52 = vcmp.ge.s32.totalorder %v50, 288
    %vm53 = vcmp.ge.s32.totalorder %v51, 288
    %v54 = vsub.s32 %v50, 288
    %v55 = vsub.s32 %v51, 288
    %v56 = vsel %vm52, %v54, %v50
    %v57 = vsel %vm53, %v55, %v51
    %v58 = vlaneseq
    %v59 = vand.u32 %v58, 127
    %v60 = vadd.s32 %v59, 128
    %v61 = vadd.s32 %v59, 256
    %vm62 = vcmp.eq.s32.totalorder %v56, %v59
    %vm63 = vcmp.eq.s32.totalorder %v56, %v60
    %vm64 = vcmp.eq.s32.totalorder %v56, %v61
    %vm65 = vcmp.eq.s32.totalorder %v57, %v59
    %vm66 = vcmp.eq.s32.totalorder %v57, %v60
    %vm67 = vcmp.eq.s32.totalorder %v57, %v61
    %v68 = vsel %vm62, 1, 0
    %v69 = vsel %vm63, 1, 0
    %v70 = vsel %vm64, 1, 0
    %v71 = vsel %vm65, 1, 0
    %v72 = vsel %vm66, 1, 0
    %v73 = vsel %vm67, 1, 0
    %v74 = vcvt.s32.f32 %v68
    %v75 = vcvt.s32.f32 %v69
    %v76 = vcvt.s32.f32 %v70
    %v77 = vcvt.s32.f32 %v71
    %v78 = vcvt.s32.f32 %v72
    %v79 = vcvt.s32.f32 %v73
    %v80 = vld [vmem:[#allocation3] sm:$0xff]
    %v81 = vld [vmem:[#allocation3 + $0x8] sm:$0xff]
    %v82 = vld [vmem:[#allocation3 + $0x10] sm:$0xff]
    %v83 = vld [vmem:[#allocation3 + $0x18] sm:$0xff]
    %v84 = vld [vmem:[#allocation3 + $0x20] sm:$0xff]
    %v85 = vld [vmem:[#allocation3 + $0x28] sm:$0xff]
    %v86 = vld [vmem:[#allocation3 + $0x30] sm:$0xff]
    %v87 = vld [vmem:[#allocation3 + $0x38] sm:$0xff]
    %v88 = vld [vmem:[#allocation3 + $0x40] sm:$0xff]
    %v89 = vld [vmem:[#allocation3 + $0x48] sm:$0xff]
    %v90 = vld [vmem:[#allocation3 + $0x50] sm:$0xff]
    %v91 = vld [vmem:[#allocation3 + $0x58] sm:$0xff]
    %v92 = vld [vmem:[#allocation3 + $0x60] sm:$0xff]
    %v93 = vld [vmem:[#allocation3 + $0x68] sm:$0xff]
    %v94 = vld [vmem:[#allocation3 + $0x70] sm:$0xff]
    %v95 = vld [vmem:[#allocation3 + $0x78] sm:$0xff]
    %v96 = vld [vmem:[#allocation3 + $0x80] sm:$0xff]
    %v97 = vld [vmem:[#allocation3 + $0x88] sm:$0xff]
    %v98 = vld [vmem:[#allocation3 + $0x90] sm:$0xff]
    %v99 = vld [vmem:[#allocation3 + $0x98] sm:$0xff]
    %v100 = vld [vmem:[#allocation3 + $0xa0] sm:$0xff]
    %v101 = vld [vmem:[#allocation3 + $0xa8] sm:$0xff]
    %v102 = vld [vmem:[#allocation3 + $0xb0] sm:$0xff]
    %v103 = vld [vmem:[#allocation3 + $0xb8] sm:$0xff]
    %v104 = vld [vmem:[#allocation3 + $0xc0] sm:$0xff]
    %v105 = vld [vmem:[#allocation3 + $0xc8] sm:$0xff]
    %v106 = vld [vmem:[#allocation3 + $0xd0] sm:$0xff]
    %v107 = vld [vmem:[#allocation3 + $0xd8] sm:$0xff]
    %v108 = vld [vmem:[#allocation3 + $0xe0] sm:$0xff]
    %v109 = vld [vmem:[#allocation3 + $0xe8] sm:$0xff]
    %v110 = vld [vmem:[#allocation3 + $0xf0] sm:$0xff]
    %v111 = vld [vmem:[#allocation3 + $0xf8] sm:$0xff]
    %v112 = vld [vmem:[#allocation3 + $0x100] sm:$0xff]
    %v113 = vld [vmem:[#allocation3 + $0x108] sm:$0xff]
    %v114 = vld [vmem:[#allocation3 + $0x110] sm:$0xff]
    %v115 = vld [vmem:[#allocation3 + $0x118] sm:$0xff]
    %v116 = vld [vmem:[#allocation3 + $0x120] sm:$0xff]
    %v117 = vld [vmem:[#allocation3 + $0x128] sm:$0xff]
    %v118 = vld [vmem:[#allocation3 + $0x130] sm:$0xff]
    %v119 = vld [vmem:[#allocation3 + $0x138] sm:$0xff]
    %v120 = vld [vmem:[#allocation3 + $0x140] sm:$0xff]
    %v121 = vld [vmem:[#allocation3 + $0x148] sm:$0xff]
    %v122 = vld [vmem:[#allocation3 + $0x150] sm:$0xff]
    %v123 = vld [vmem:[#allocation3 + $0x158] sm:$0xff]
    %v124 = vld [vmem:[#allocation3 + $0x160] sm:$0xff]
    %v125 = vld [vmem:[#allocation3 + $0x168] sm:$0xff]
    %v126 = vld [vmem:[#allocation3 + $0x170] sm:$0xff]
    %v127 = vld [vmem:[#allocation3 + $0x178] sm:$0xff]
    %v128 = vld [vmem:[#allocation3 + $0x180] sm:$0xff]
    %v129 = vld [vmem:[#allocation3 + $0x188] sm:$0xff]
    %v130 = vld [vmem:[#allocation3 + $0x190] sm:$0xff]
    %v131 = vld [vmem:[#allocation3 + $0x198] sm:$0xff]
    %v132 = vld [vmem:[#allocation3 + $0x1a0] sm:$0xff]
    %v133 = vld [vmem:[#allocation3 + $0x1a8] sm:$0xff]
    %v134 = vld [vmem:[#allocation3 + $0x1b0] sm:$0xff]
    %v135 = vld [vmem:[#allocation3 + $0x1b8] sm:$0xff]
    %v136 = vld [vmem:[#allocation3 + $0x1c0] sm:$0xff]
    %v137 = vld [vmem:[#allocation3 + $0x1c8] sm:$0xff]
    %v138 = vld [vmem:[#allocation3 + $0x1d0] sm:$0xff]
    %v139 = vld [vmem:[#allocation3 + $0x1d8] sm:$0xff]
    %v140 = vld [vmem:[#allocation3 + $0x1e0] sm:$0xff]
    %v141 = vld [vmem:[#allocation3 + $0x1e8] sm:$0xff]
    %v142 = vld [vmem:[#allocation3 + $0x1f0] sm:$0xff]
    %v143 = vld [vmem:[#allocation3 + $0x1f8] sm:$0xff]
    %v144 = vld [vmem:[#allocation3 + $0x200] sm:$0xff]
    %v145 = vld [vmem:[#allocation3 + $0x208] sm:$0xff]
    %v146 = vld [vmem:[#allocation3 + $0x210] sm:$0xff]
    %v147 = vld [vmem:[#allocation3 + $0x218] sm:$0xff]
    %v148 = vld [vmem:[#allocation3 + $0x220] sm:$0xff]
    %v149 = vld [vmem:[#allocation3 + $0x228] sm:$0xff]
    %v150 = vld [vmem:[#allocation3 + $0x230] sm:$0xff]
    %v151 = vld [vmem:[#allocation3 + $0x238] sm:$0xff]
    %v152 = vld [vmem:[#allocation3 + $0x240] sm:$0xff]
    %v153 = vld [vmem:[#allocation3 + $0x248] sm:$0xff]
    %v154 = vld [vmem:[#allocation3 + $0x250] sm:$0xff]
    %v155 = vld [vmem:[#allocation3 + $0x258] sm:$0xff]
    %v156 = vld [vmem:[#allocation3 + $0x260] sm:$0xff]
    %v157 = vld [vmem:[#allocation3 + $0x268] sm:$0xff]
    %v158 = vld [vmem:[#allocation3 + $0x270] sm:$0xff]
    %v159 = vld [vmem:[#allocation3 + $0x278] sm:$0xff]
    %v160 = vld [vmem:[#allocation3 + $0x280] sm:$0xff]
    %v161 = vld [vmem:[#allocation3 + $0x288] sm:$0xff]
    %v162 = vld [vmem:[#allocation3 + $0x290] sm:$0xff]
    %v163 = vld [vmem:[#allocation3 + $0x298] sm:$0xff]
    %v164 = vld [vmem:[#allocation3 + $0x2a0] sm:$0xff]
    %v165 = vld [vmem:[#allocation3 + $0x2a8] sm:$0xff]
    %v166 = vld [vmem:[#allocation3 + $0x2b0] sm:$0xff]
    %v167 = vld [vmem:[#allocation3 + $0x2b8] sm:$0xff]
    %v168 = vld [vmem:[#allocation3 + $0x2c0] sm:$0xff]
    %v169 = vld [vmem:[#allocation3 + $0x2c8] sm:$0xff]
    %v170 = vld [vmem:[#allocation3 + $0x2d0] sm:$0xff]
    %v171 = vld [vmem:[#allocation3 + $0x2d8] sm:$0xff]
    %v172 = vld [vmem:[#allocation3 + $0x2e0] sm:$0xff]
    %v173 = vld [vmem:[#allocation3 + $0x2e8] sm:$0xff]
    %v174 = vld [vmem:[#allocation3 + $0x2f0] sm:$0xff]
    %v175 = vld [vmem:[#allocation3 + $0x2f8] sm:$0xff]
    %v176 = vld [vmem:[#allocation3 + $0x300] sm:$0xff]
    %v177 = vld [vmem:[#allocation3 + $0x308] sm:$0xff]
    %v178 = vld [vmem:[#allocation3 + $0x310] sm:$0xff]
    %v179 = vld [vmem:[#allocation3 + $0x318] sm:$0xff]
    %v180 = vld [vmem:[#allocation3 + $0x320] sm:$0xff]
    %v181 = vld [vmem:[#allocation3 + $0x328] sm:$0xff]
    %v182 = vld [vmem:[#allocation3 + $0x330] sm:$0xff]
    %v183 = vld [vmem:[#allocation3 + $0x338] sm:$0xff]
    %v184 = vld [vmem:[#allocation3 + $0x340] sm:$0xff]
    %v185 = vld [vmem:[#allocation3 + $0x348] sm:$0xff]
    %v186 = vld [vmem:[#allocation3 + $0x350] sm:$0xff]
    %v187 = vld [vmem:[#allocation3 + $0x358] sm:$0xff]
    %vm188 = vcmask 261120
    %v190 = vsel %vm188, %v76, 0
    %v193 = vsel %vm188, %v79, 0
    %195 = vmatprep.subr.mxu0 %v81
    %196 = vmatpush1.msra.mxu0 %v80
    %197 = vmatprep.subr.mxu0 %v84
    %198 = vmatpush1.msra.mxu0 %v83
    %199 = vmatprep.subr.mxu0 %v87
    %200 = vmatpush1.msra.mxu0 %v86
    %201 = vmatprep.subr.mxu0 %v90
    %202 = vmatpush1.msra.mxu0 %v89
    %203 = vmatprep.subr.mxu0 %v93
    %204 = vmatpush1.msra.mxu0 %v92
    %205 = vmatprep.subr.mxu0 %v96
    %206 = vmatpush1.msra.mxu0 %v95
    %207 = vmatprep.subr.mxu0 %v99
    %208 = vmatpush1.msra.mxu0 %v98
    %209 = vmatprep.subr.mxu0 %v102
    %210 = vmatpush1.msra.mxu0 %v101
    %211 = vmatprep.subr.mxu0 %v105
    %212 = vmatpush1.msra.mxu0 %v104
    %213 = vmatprep.subr.mxu0 %v108
    %214 = vmatpush1.msra.mxu0 %v107
    %215 = vmatprep.subr.mxu0 %v111
    %216 = vmatpush1.msra.mxu0 %v110
    %217 = vmatprep.subr.mxu0 %v114
    %218 = vmatpush1.msra.mxu0 %v113
    %219 = vmatprep.subr.mxu0 %v117
    %220 = vmatpush1.msra.mxu0 %v116
    %221 = vmatprep.subr.mxu0 %v120
    %222 = vmatpush1.msra.mxu0 %v119
    %223 = vmatprep.subr.mxu0 %v123
    %224 = vmatpush1.msra.mxu0 %v122
    %225 = vmatprep.subr.mxu0 %v126
    %226 = vmatpush1.msra.mxu0 %v125
    %227 = vmatprep.subr.mxu0 %v129
    %228 = vmatpush1.msra.mxu0 %v128
    %229 = vmatprep.subr.mxu0 %v132
    %230 = vmatpush1.msra.mxu0 %v131
    %231 = vmatprep.subr.mxu0 %v135
    %232 = vmatpush1.msra.mxu0 %v134
    %233 = vmatprep.subr.mxu0 %v138
    %234 = vmatpush1.msra.mxu0 %v137
    %235 = vmatprep.subr.mxu0 %v141
    %236 = vmatpush1.msra.mxu0 %v140
    %237 = vmatprep.subr.mxu0 %v144
    %238 = vmatpush1.msra.mxu0 %v143
    %239 = vmatprep.subr.mxu0 %v147
    %240 = vmatpush1.msra.mxu0 %v146
    %241 = vmatprep.subr.mxu0 %v150
    %242 = vmatpush1.msra.mxu0 %v149
    %243 = vmatprep.subr.mxu0 %v153
    %244 = vmatpush1.msra.mxu0 %v152
    %245 = vmatprep.subr.mxu0 %v156
    %246 = vmatpush1.msra.mxu0 %v155
    %247 = vmatprep.subr.mxu0 %v159
    %248 = vmatpush1.msra.mxu0 %v158
    %249 = vmatprep.subr.mxu0 %v162
    %250 = vmatpush1.msra.mxu0 %v161
    %251 = vmatprep.subr.mxu0 %v165
    %252 = vmatpush1.msra.mxu0 %v164
    %253 = vmatprep.subr.mxu0 %v168
    %254 = vmatpush1.msra.mxu0 %v167
    %255 = vmatprep.subr.mxu0 %v171
    %256 = vmatpush1.msra.mxu0 %v170
    %257 = vmatprep.subr.mxu0 %v174
    %258 = vmatpush1.msra.mxu0 %v173
    %259 = vmatprep.mubr.f32.mxu0 %v75
    %260 = vmatmul.mubr.f32.gmra.mrb[0].mxu0 %v74
    %v261 = vpop.f32.mrb[0].mxu0
    %v262 = vadd.f32 0.0, %v261
    %v263 = vpop.f32.mrb[0].mxu0
    %v264 = vadd.f32 0.0, %v263
    %265 = vmatprep.mubr.f32.mxu0 %v78
    %266 = vmatmul.mubr.f32.gmra.mrb[0].mxu0 %v77
    %v267 = vpop.f32.mrb[0].mxu0
    %v268 = vadd.f32 0.0, %v267
    %v269 = vpop.f32.mrb[0].mxu0
    %v270 = vadd.f32 0.0, %v269
    %271 = vdwg.mxu0
    %272 = vmatprep.subr.mxu0 %v177
    %273 = vmatpush1.msra.mxu0 %v176
    %274 = vmatprep.subr.mxu0 %v180
    %275 = vmatpush1.msra.mxu0 %v179
    %276 = vmatprep.subr.mxu0 %v183
    %277 = vmatpush1.msra.mxu0 %v182
    %278 = vmatprep.subr.mxu0 %v186
    %279 = vmatpush1.msra.mxu0 %v185
    %280 = vmatprep.subr.mxu0 0.0
    %281 = vmatpush1.msra.mxu0 0.0
    %282 = vmatprep.subr.mxu0 0.0
    %283 = vmatpush1.msra.mxu0 0.0
    %284 = vmatprep.subr.mxu0 0.0
    %285 = vmatpush1.msra.mxu0 0.0
    %286 = vmatprep.subr.mxu0 0.0
    %287 = vmatpush1.msra.mxu0 0.0
    %288 = vmatprep.subr.mxu0 0.0
    %289 = vmatpush1.msra.mxu0 0.0
    %290 = vmatprep.subr.mxu0 0.0
    %291 = vmatpush1.msra.mxu0 0.0
    %292 = vmatprep.subr.mxu0 0.0
    %293 = vmatpush1.msra.mxu0 0.0
    %294 = vmatprep.subr.mxu0 0.0
    %295 = vmatpush1.msra.mxu0 0.0
    %296 = vmatprep.subr.mxu0 0.0
    %297 = vmatpush1.msra.mxu0 0.0
    %298 = vmatprep.subr.mxu0 0.0
    %299 = vmatpush1.msra.mxu0 0.0
    %300 = vmatprep.subr.mxu0 0.0
    %301 = vmatpush1.msra.mxu0 0.0
    %302 = vmatprep.subr.mxu0 0.0
    %303 = vmatpush1.msra.mxu0 0.0
    %304 = vmatprep.subr.mxu0 0.0
    %305 = vmatpush1.msra.mxu0 0.0
    %306 = vmatprep.subr.mxu0 0.0
    %307 = vmatpush1.msra.mxu0 0.0
    %308 = vmatprep.subr.mxu0 0.0
    %309 = vmatpush1.msra.mxu0 0.0
    %310 = vmatprep.subr.mxu0 0.0
    %311 = vmatpush1.msra.mxu0 0.0
    %312 = vmatprep.subr.mxu0 0.0
    %313 = vmatpush1.msra.mxu0 0.0
    %314 = vmatprep.subr.mxu0 0.0
    %315 = vmatpush1.msra.mxu0 0.0
    %316 = vmatprep.subr.mxu0 0.0
    %317 = vmatpush1.msra.mxu0 0.0
    %318 = vmatprep.subr.mxu0 0.0
    %319 = vmatpush1.msra.mxu0 0.0
    %320 = vmatprep.subr.mxu0 0.0
    %321 = vmatpush1.msra.mxu0 0.0
    %322 = vmatprep.subr.mxu0 0.0
    %323 = vmatpush1.msra.mxu0 0.0
    %324 = vmatprep.subr.mxu0 0.0
    %325 = vmatpush1.msra.mxu0 0.0
    %326 = vmatprep.subr.mxu0 0.0
    %327 = vmatpush1.msra.mxu0 0.0
    %328 = vmatprep.subr.mxu0 0.0
    %329 = vmatpush1.msra.mxu0 0.0
    %330 = vmatprep.subr.mxu0 0.0
    %331 = vmatpush1.msra.mxu0 0.0
    %332 = vmatprep.subr.mxu0 0.0
    %333 = vmatpush1.msra.mxu0 0.0
    %334 = vmatprep.subr.mxu0 0.0
    %335 = vmatpush1.msra.mxu0 0.0
    %336 = vmatprep.mubr.f32.mxu0 0.0
    %337 = vmatmul.mubr.f32.gmra.mrb[0].mxu0 %v190
    %v338 = vpop.f32.mrb[0].mxu0
    %v339 = vadd.f32 %v262, %v338
    %v340 = vpop.f32.mrb[0].mxu0
    %v341 = vadd.f32 %v264, %v340
    %342 = vmatprep.mubr.f32.mxu0 0.0
    %343 = vmatmul.mubr.f32.gmra.mrb[0].mxu0 %v193
    %v344 = vpop.f32.mrb[0].mxu0
    %v345 = vadd.f32 %v268, %v344
    %v346 = vpop.f32.mrb[0].mxu0
    %v347 = vadd.f32 %v270, %v346
    %348 = vdwg.mxu0
    %349 = vmatprep.subr.mxu0 0.0
    %350 = vmatpush1.msra.mxu0 %v82
    %351 = vmatprep.subr.mxu0 0.0
    %352 = vmatpush1.msra.mxu0 %v85
    %353 = vmatprep.subr.mxu0 0.0
    %354 = vmatpush1.msra.mxu0 %v88
    %355 = vmatprep.subr.mxu0 0.0
    %356 = vmatpush1.msra.mxu0 %v91
    %357 = vmatprep.subr.mxu0 0.0
    %358 = vmatpush1.msra.mxu0 %v94
    %359 = vmatprep.subr.mxu0 0.0
    %360 = vmatpush1.msra.mxu0 %v97
    %361 = vmatprep.subr.mxu0 0.0
    %362 = vmatpush1.msra.mxu0 %v100
    %363 = vmatprep.subr.mxu0 0.0
    %364 = vmatpush1.msra.mxu0 %v103
    %365 = vmatprep.subr.mxu0 0.0
    %366 = vmatpush1.msra.mxu0 %v106
    %367 = vmatprep.subr.mxu0 0.0
    %368 = vmatpush1.msra.mxu0 %v109
    %369 = vmatprep.subr.mxu0 0.0
    %370 = vmatpush1.msra.mxu0 %v112
    %371 = vmatprep.subr.mxu0 0.0
    %372 = vmatpush1.msra.mxu0 %v115
    %373 = vmatprep.subr.mxu0 0.0
    %374 = vmatpush1.msra.mxu0 %v118
    %375 = vmatprep.subr.mxu0 0.0
    %376 = vmatpush1.msra.mxu0 %v121
    %377 = vmatprep.subr.mxu0 0.0
    %378 = vmatpush1.msra.mxu0 %v124
    %379 = vmatprep.subr.mxu0 0.0
    %380 = vmatpush1.msra.mxu0 %v127
    %381 = vmatprep.subr.mxu0 0.0
    %382 = vmatpush1.msra.mxu0 %v130
    %383 = vmatprep.subr.mxu0 0.0
    %384 = vmatpush1.msra.mxu0 %v133
    %385 = vmatprep.subr.mxu0 0.0
    %386 = vmatpush1.msra.mxu0 %v136
    %387 = vmatprep.subr.mxu0 0.0
    %388 = vmatpush1.msra.mxu0 %v139
    %389 = vmatprep.subr.mxu0 0.0
    %390 = vmatpush1.msra.mxu0 %v142
    %391 = vmatprep.subr.mxu0 0.0
    %392 = vmatpush1.msra.mxu0 %v145
    %393 = vmatprep.subr.mxu0 0.0
    %394 = vmatpush1.msra.mxu0 %v148
    %395 = vmatprep.subr.mxu0 0.0
    %396 = vmatpush1.msra.mxu0 %v151
    %397 = vmatprep.subr.mxu0 0.0
    %398 = vmatpush1.msra.mxu0 %v154
    %399 = vmatprep.subr.mxu0 0.0
    %400 = vmatpush1.msra.mxu0 %v157
    %401 = vmatprep.subr.mxu0 0.0
    %402 = vmatpush1.msra.mxu0 %v160
    %403 = vmatprep.subr.mxu0 0.0
    %404 = vmatpush1.msra.mxu0 %v163
    %405 = vmatprep.subr.mxu0 0.0
    %406 = vmatpush1.msra.mxu0 %v166
    %407 = vmatprep.subr.mxu0 0.0
    %408 = vmatpush1.msra.mxu0 %v169
    %409 = vmatprep.subr.mxu0 0.0
    %410 = vmatpush1.msra.mxu0 %v172
    %411 = vmatprep.subr.mxu0 0.0
    %412 = vmatpush1.msra.mxu0 %v175
    %413 = vmatprep.mubr.f32.mxu0 %v75
    %414 = vmatmul.mubr.f32.gmra.mrb[0].mxu0 %v74
    %v415 = vpop.f32.mrb[0].mxu0
    %v416 = vadd.f32 0.0, %v415
    %v417 = vpop.f32.mrb[0].mxu0
    %418 = vmatprep.mubr.f32.mxu0 %v78
    %419 = vmatmul.mubr.f32.gmra.mrb[0].mxu0 %v77
    %v420 = vpop.f32.mrb[0].mxu0
    %v421 = vadd.f32 0.0, %v420
    %v422 = vpop.f32.mrb[0].mxu0
    %423 = vdwg.mxu0
    %424 = vmatprep.subr.mxu0 0.0
    %425 = vmatpush1.msra.mxu0 %v178
    %426 = vmatprep.subr.mxu0 0.0
    %427 = vmatpush1.msra.mxu0 %v181
    %428 = vmatprep.subr.mxu0 0.0
    %429 = vmatpush1.msra.mxu0 %v184
    %430 = vmatprep.subr.mxu0 0.0
    %431 = vmatpush1.msra.mxu0 %v187
    %432 = vmatprep.subr.mxu0 0.0
    %433 = vmatpush1.msra.mxu0 0.0
    %434 = vmatprep.subr.mxu0 0.0
    %435 = vmatpush1.msra.mxu0 0.0
    %436 = vmatprep.subr.mxu0 0.0
    %437 = vmatpush1.msra.mxu0 0.0
    %438 = vmatprep.subr.mxu0 0.0
    %439 = vmatpush1.msra.mxu0 0.0
    %440 = vmatprep.subr.mxu0 0.0
    %441 = vmatpush1.msra.mxu0 0.0
    %442 = vmatprep.subr.mxu0 0.0
    %443 = vmatpush1.msra.mxu0 0.0
    %444 = vmatprep.subr.mxu0 0.0
    %445 = vmatpush1.msra.mxu0 0.0
    %446 = vmatprep.subr.mxu0 0.0
    %447 = vmatpush1.msra.mxu0 0.0
    %448 = vmatprep.subr.mxu0 0.0
    %449 = vmatpush1.msra.mxu0 0.0
    %450 = vmatprep.subr.mxu0 0.0
    %451 = vmatpush1.msra.mxu0 0.0
    %452 = vmatprep.subr.mxu0 0.0
    %453 = vmatpush1.msra.mxu0 0.0
    %454 = vmatprep.subr.mxu0 0.0
    %455 = vmatpush1.msra.mxu0 0.0
    %456 = vmatprep.subr.mxu0 0.0
    %457 = vmatpush1.msra.mxu0 0.0
    %458 = vmatprep.subr.mxu0 0.0
    %459 = vmatpush1.msra.mxu0 0.0
    %460 = vmatprep.subr.mxu0 0.0
    %461 = vmatpush1.msra.mxu0 0.0
    %462 = vmatprep.subr.mxu0 0.0
    %463 = vmatpush1.msra.mxu0 0.0
    %464 = vmatprep.subr.mxu0 0.0
    %465 = vmatpush1.msra.mxu0 0.0
    %466 = vmatprep.subr.mxu0 0.0
    %467 = vmatpush1.msra.mxu0 0.0
    %468 = vmatprep.subr.mxu0 0.0
    %469 = vmatpush1.msra.mxu0 0.0
    %470 = vmatprep.subr.mxu0 0.0
    %471 = vmatpush1.msra.mxu0 0.0
    %472 = vmatprep.subr.mxu0 0.0
    %473 = vmatpush1.msra.mxu0 0.0
    %474 = vmatprep.subr.mxu0 0.0
    %475 = vmatpush1.msra.mxu0 0.0
    %476 = vmatprep.subr.mxu0 0.0
    %477 = vmatpush1.msra.mxu0 0.0
    %478 = vmatprep.subr.mxu0 0.0
    %479 = vmatpush1.msra.mxu0 0.0
    %480 = vmatprep.subr.mxu0 0.0
    %481 = vmatpush1.msra.mxu0 0.0
    %482 = vmatprep.subr.mxu0 0.0
    %483 = vmatpush1.msra.mxu0 0.0
    %484 = vmatprep.subr.mxu0 0.0
    %485 = vmatpush1.msra.mxu0 0.0
    %486 = vmatprep.subr.mxu0 0.0
    %487 = vmatpush1.msra.mxu0 0.0
    %488 = vmatprep.mubr.f32.mxu0 0.0
    %489 = vmatmul.mubr.f32.gmra.mrb[0].mxu0 %v190
    %v490 = vpop.f32.mrb[0].mxu0
    %v491 = vadd.f32 %v416, %v490
    %v492 = vpop.f32.mrb[0].mxu0
    %493 = vmatprep.mubr.f32.mxu0 0.0
    %494 = vmatmul.mubr.f32.gmra.mrb[0].mxu0 %v193
    %v495 = vpop.f32.mrb[0].mxu0
    %v496 = vadd.f32 %v421, %v495
    %v497 = vpop.f32.mrb[0].mxu0
    %498 = vdwg.mxu0
    %v499 = vld [vmem:[%s2] sm:$0xff]
    %v500 = vld [vmem:[%s2 + $0x8] sm:$0xff]
    %v501 = vld [vmem:[%s2 + $0x10] sm:$0xff]
    %v502 = vld [vmem:[%s2 + $0x18] sm:$0xff]
    %v503 = vld [vmem:[%s2 + $0x20] sm:$0xff]
    %v504 = vld [vmem:[%s2 + $0x28] sm:$0xff]
    %v505 = vld [vmem:[%s2 + $0x30] sm:$0xff]
    %v506 = vld [vmem:[%s2 + $0x38] sm:$0xff]
    %v507 = vld [vmem:[%s2 + $0x40] sm:$0xff]
    %v508 = vld [vmem:[%s2 + $0x48] sm:$0xff]
    %v509 = vld [vmem:[%s2 + $0x50] sm:$0xff]
    %v510 = vld [vmem:[%s2 + $0x58] sm:$0xff]
    %v511 = vld [vmem:[%s2 + $0x60] sm:$0xff]
    %v512 = vld [vmem:[%s2 + $0x68] sm:$0xff]
    %v513 = vld [vmem:[%s2 + $0x70] sm:$0xff]
    %v514 = vld [vmem:[%s2 + $0x78] sm:$0xff]
    %v515 = vld [vmem:[%s2 + $0x80] sm:$0xff]
    %v516 = vld [vmem:[%s2 + $0x88] sm:$0xff]
    %v517 = vld [vmem:[%s2 + $0x90] sm:$0xff]
    %v518 = vld [vmem:[%s2 + $0x98] sm:$0xff]
    %v519 = vld [vmem:[%s2 + $0xa0] sm:$0xff]
    %v520 = vld [vmem:[%s2 + $0xa8] sm:$0xff]
    %v521 = vld [vmem:[%s2 + $0xb0] sm:$0xff]
    %v522 = vld [vmem:[%s2 + $0xb8] sm:$0xff]
    %v523 = vld [vmem:[%s2 + $0xc0] sm:$0xff]
    %v524 = vld [vmem:[%s2 + $0xc8] sm:$0xff]
    %v525 = vld [vmem:[%s2 + $0xd0] sm:$0xff]
    %v526 = vld [vmem:[%s2 + $0xd8] sm:$0xff]
    %v527 = vld [vmem:[%s2 + $0xe0] sm:$0xff]
    %v528 = vld [vmem:[%s2 + $0xe8] sm:$0xff]
    %v529 = vld [vmem:[%s2 + $0xf0] sm:$0xff]
    %v530 = vld [vmem:[%s2 + $0xf8] sm:$0xff]
    %v531 = vld [vmem:[%s2 + $0x100] sm:$0xff]
    %v532 = vld [vmem:[%s2 + $0x108] sm:$0xff]
    %v533 = vld [vmem:[%s2 + $0x110] sm:$0xff]
    %v534 = vld [vmem:[%s2 + $0x118] sm:$0xff]
    %v535 = vld [vmem:[%s3] sm:$0x1]
    %v537 = vlaneseq
    %v538 = vshrl.u32 %v537, 7
    %v539 = vsub.s32 0, %v538
    %v540 = vrot.slane %v535, %v539
    %v543 = vsel %vm188, %v491, 0
    %v546 = vsel %vm188, %v496, 0
    %548 = vmatprep.subr.mxu0 0.0
    %549 = vmatpush1.msra.mxu0 %v499
    %550 = vmatprep.subr.mxu0 0.0
    %551 = vmatpush1.msra.mxu0 %v500
    %552 = vmatprep.subr.mxu0 0.0
    %553 = vmatpush1.msra.mxu0 %v501
    %554 = vmatprep.subr.mxu0 0.0
    %555 = vmatpush1.msra.mxu0 %v502
    %556 = vmatprep.subr.mxu0 0.0
    %557 = vmatpush1.msra.mxu0 %v503
    %558 = vmatprep.subr.mxu0 0.0
    %559 = vmatpush1.msra.mxu0 %v504
    %560 = vmatprep.subr.mxu0 0.0
    %561 = vmatpush1.msra.mxu0 %v505
    %562 = vmatprep.subr.mxu0 0.0
    %563 = vmatpush1.msra.mxu0 %v506
    %564 = vmatprep.subr.mxu0 0.0
    %565 = vmatpush1.msra.mxu0 %v507
    %566 = vmatprep.subr.mxu0 0.0
    %567 = vmatpush1.msra.mxu0 %v508
    %568 = vmatprep.subr.mxu0 0.0
    %569 = vmatpush1.msra.mxu0 %v509
    %570 = vmatprep.subr.mxu0 0.0
    %571 = vmatpush1.msra.mxu0 %v510
    %572 = vmatprep.subr.mxu0 0.0
    %573 = vmatpush1.msra.mxu0 %v511
    %574 = vmatprep.subr.mxu0 0.0
    %575 = vmatpush1.msra.mxu0 %v512
    %576 = vmatprep.subr.mxu0 0.0
    %577 = vmatpush1.msra.mxu0 %v513
    %578 = vmatprep.subr.mxu0 0.0
    %579 = vmatpush1.msra.mxu0 %v514
    %580 = vmatprep.subr.mxu0 0.0
    %581 = vmatpush1.msra.mxu0 %v515
    %582 = vmatprep.subr.mxu0 0.0
    %583 = vmatpush1.msra.mxu0 %v516
    %584 = vmatprep.subr.mxu0 0.0
    %585 = vmatpush1.msra.mxu0 %v517
    %586 = vmatprep.subr.mxu0 0.0
    %587 = vmatpush1.msra.mxu0 %v518
    %588 = vmatprep.subr.mxu0 0.0
    %589 = vmatpush1.msra.mxu0 %v519
    %590 = vmatprep.subr.mxu0 0.0
    %591 = vmatpush1.msra.mxu0 %v520
    %592 = vmatprep.subr.mxu0 0.0
    %593 = vmatpush1.msra.mxu0 %v521
    %594 = vmatprep.subr.mxu0 0.0
    %595 = vmatpush1.msra.mxu0 %v522
    %596 = vmatprep.subr.mxu0 0.0
    %597 = vmatpush1.msra.mxu0 %v523
    %598 = vmatprep.subr.mxu0 0.0
    %599 = vmatpush1.msra.mxu0 %v524
    %600 = vmatprep.subr.mxu0 0.0
    %601 = vmatpush1.msra.mxu0 %v525
    %602 = vmatprep.subr.mxu0 0.0
    %603 = vmatpush1.msra.mxu0 %v526
    %604 = vmatprep.subr.mxu0 0.0
    %605 = vmatpush1.msra.mxu0 %v527
    %606 = vmatprep.subr.mxu0 0.0
    %607 = vmatpush1.msra.mxu0 %v528
    %608 = vmatprep.subr.mxu0 0.0
    %609 = vmatpush1.msra.mxu0 %v529
    %610 = vmatprep.subr.mxu0 0.0
    %611 = vmatpush1.msra.mxu0 %v530
    %612 = vmatprep.mubr.f32.mxu0 %v341
    %613 = vmatmul.mubr.f32.gmra.mrb[0].mxu0 %v339
    %v614 = vpop.f32.mrb[0].mxu0
    %v615 = vadd.f32 %v540, %v614
    %v616 = vpop.f32.mrb[0].mxu0
    %617 = vmatprep.mubr.f32.mxu0 %v347
    %618 = vmatmul.mubr.f32.gmra.mrb[0].mxu0 %v345
    %v619 = vpop.f32.mrb[0].mxu0
    %v620 = vadd.f32 %v540, %v619
    %v621 = vpop.f32.mrb[0].mxu0
    %622 = vdwg.mxu0
    %623 = vmatprep.subr.mxu0 0.0
    %624 = vmatpush1.msra.mxu0 %v531
    %625 = vmatprep.subr.mxu0 0.0
    %626 = vmatpush1.msra.mxu0 %v532
    %627 = vmatprep.subr.mxu0 0.0
    %628 = vmatpush1.msra.mxu0 %v533
    %629 = vmatprep.subr.mxu0 0.0
    %630 = vmatpush1.msra.mxu0 %v534
    %631 = vmatprep.subr.mxu0 0.0
    %632 = vmatpush1.msra.mxu0 0.0
    %633 = vmatprep.subr.mxu0 0.0
    %634 = vmatpush1.msra.mxu0 0.0
    %635 = vmatprep.subr.mxu0 0.0
    %636 = vmatpush1.msra.mxu0 0.0
    %637 = vmatprep.subr.mxu0 0.0
    %638 = vmatpush1.msra.mxu0 0.0
    %639 = vmatprep.subr.mxu0 0.0
    %640 = vmatpush1.msra.mxu0 0.0
    %641 = vmatprep.subr.mxu0 0.0
    %642 = vmatpush1.msra.mxu0 0.0
    %643 = vmatprep.subr.mxu0 0.0
    %644 = vmatpush1.msra.mxu0 0.0
    %645 = vmatprep.subr.mxu0 0.0
    %646 = vmatpush1.msra.mxu0 0.0
    %647 = vmatprep.subr.mxu0 0.0
    %648 = vmatpush1.msra.mxu0 0.0
    %649 = vmatprep.subr.mxu0 0.0
    %650 = vmatpush1.msra.mxu0 0.0
    %651 = vmatprep.subr.mxu0 0.0
    %652 = vmatpush1.msra.mxu0 0.0
    %653 = vmatprep.subr.mxu0 0.0
    %654 = vmatpush1.msra.mxu0 0.0
    %655 = vmatprep.subr.mxu0 0.0
    %656 = vmatpush1.msra.mxu0 0.0
    %657 = vmatprep.subr.mxu0 0.0
    %658 = vmatpush1.msra.mxu0 0.0
    %659 = vmatprep.subr.mxu0 0.0
    %660 = vmatpush1.msra.mxu0 0.0
    %661 = vmatprep.subr.mxu0 0.0
    %662 = vmatpush1.msra.mxu0 0.0
    %663 = vmatprep.subr.mxu0 0.0
    %664 = vmatpush1.msra.mxu0 0.0
    %665 = vmatprep.subr.mxu0 0.0
    %666 = vmatpush1.msra.mxu0 0.0
    %667 = vmatprep.subr.mxu0 0.0
    %668 = vmatpush1.msra.mxu0 0.0
    %669 = vmatprep.subr.mxu0 0.0
    %670 = vmatpush1.msra.mxu0 0.0
    %671 = vmatprep.subr.mxu0 0.0
    %672 = vmatpush1.msra.mxu0 0.0
    %673 = vmatprep.subr.mxu0 0.0
    %674 = vmatpush1.msra.mxu0 0.0
    %675 = vmatprep.subr.mxu0 0.0
    %676 = vmatpush1.msra.mxu0 0.0
    %677 = vmatprep.subr.mxu0 0.0
    %678 = vmatpush1.msra.mxu0 0.0
    %679 = vmatprep.subr.mxu0 0.0
    %680 = vmatpush1.msra.mxu0 0.0
    %681 = vmatprep.subr.mxu0 0.0
    %682 = vmatpush1.msra.mxu0 0.0
    %683 = vmatprep.subr.mxu0 0.0
    %684 = vmatpush1.msra.mxu0 0.0
    %685 = vmatprep.subr.mxu0 0.0
    %686 = vmatpush1.msra.mxu0 0.0
    %687 = vmatprep.mubr.f32.mxu0 0.0
    %688 = vmatmul.mubr.f32.gmra.mrb[0].mxu0 %v543
    %v689 = vpop.f32.mrb[0].mxu0
    %v690 = vadd.f32 %v615, %v689
    %v691 = vpop.f32.mrb[0].mxu0
    %692 = vmatprep.mubr.f32.mxu0 0.0
    %693 = vmatmul.mubr.f32.gmra.mrb[0].mxu0 %v546
    %v694 = vpop.f32.mrb[0].mxu0
    %v695 = vadd.f32 %v620, %v694
    %v696 = vpop.f32.mrb[0].mxu0
    %697 = vdwg.mxu0
    %698 = vst.msk [vmem:[%s4] sm:$0xff] %vm188, %v690
    %vm699 = vcmask 257024
    %700 = vst.msk [vmem:[%s4 + $0x8] sm:$0xf] %vm699, %v695
    %701 = vst.msk [vmem:[%s4 + $0x10] sm:$0xff] %vm188, %v690
    %702 = vst.msk [vmem:[%s4 + $0x18] sm:$0xf] %vm699, %v695
    %703 = vst.msk [vmem:[%s4 + $0x20] sm:$0xff] %vm188, %v690
    %704 = vst.msk [vmem:[%s4 + $0x28] sm:$0xf] %vm699, %v695
    %705 = vst.msk [vmem:[%s4 + $0x30] sm:$0xff] %vm188, %v690
    %706 = vst.msk [vmem:[%s4 + $0x38] sm:$0xf] %vm699, %v695
    %707 = vst.msk [vmem:[%s4 + $0x40] sm:$0xff] %vm188, %v690
    %708 = vst.msk [vmem:[%s4 + $0x48] sm:$0xf] %vm699, %v695
    %709 = vst.msk [vmem:[%s4 + $0x50] sm:$0xff] %vm188, %v690
    %710 = vst.msk [vmem:[%s4 + $0x58] sm:$0xf] %vm699, %v695
    %711 = vst.msk [vmem:[%s4 + $0x60] sm:$0xff] %vm188, %v690
    %712 = vst.msk [vmem:[%s4 + $0x68] sm:$0xf] %vm699, %v695
    %713 = vst.msk [vmem:[%s4 + $0x70] sm:$0xff] %vm188, %v690
    %714 = vst.msk [vmem:[%s4 + $0x78] sm:$0xf] %vm699, %v695
    %715 = vst.msk [vmem:[%s4 + $0x80] sm:$0xff] %vm188, %v690
    %716 = vst.msk [vmem:[%s4 + $0x88] sm:$0xf] %vm699, %v695
    %717 = vst.msk [vmem:[%s4 + $0x90] sm:$0xff] %vm188, %v690
    %718 = vst.msk [vmem:[%s4 + $0x98] sm:$0xf] %vm699, %v695
    %719 = vst.msk [vmem:[%s4 + $0xa0] sm:$0xff] %vm188, %v690
    %720 = vst.msk [vmem:[%s4 + $0xa8] sm:$0xf] %vm699, %v695
    %721 = vst.msk [vmem:[%s4 + $0xb0] sm:$0xff] %vm188, %v690
    %722 = vst.msk [vmem:[%s4 + $0xb8] sm:$0xf] %vm699, %v695
    %723 = vst.msk [vmem:[%s4 + $0xc0] sm:$0xff] %vm188, %v690
    %724 = vst.msk [vmem:[%s4 + $0xc8] sm:$0xf] %vm699, %v695
    %725 = vst.msk [vmem:[%s4 + $0xd0] sm:$0xff] %vm188, %v690
    %726 = vst.msk [vmem:[%s4 + $0xd8] sm:$0xf] %vm699, %v695
    %727 = vst.msk [vmem:[%s4 + $0xe0] sm:$0xff] %vm188, %v690
    %728 = vst.msk [vmem:[%s4 + $0xe8] sm:$0xf] %vm699, %v695
    %729 = vst.msk [vmem:[%s4 + $0xf0] sm:$0xff] %vm188, %v690
    %730 = vst.msk [vmem:[%s4 + $0xf8] sm:$0xf] %vm699, %v695
    %731 = vst.msk [vmem:[%s4 + $0x100] sm:$0xff] %vm188, %v690
    %732 = vst.msk [vmem:[%s4 + $0x108] sm:$0xf] %vm699, %v695
    %733 = vst.msk [vmem:[%s4 + $0x110] sm:$0xff] %vm188, %v690
    %734 = vst.msk [vmem:[%s4 + $0x118] sm:$0xf] %vm699, %v695
    %735 = vst.msk [vmem:[%s4 + $0x120] sm:$0xff] %vm188, %v690
    %736 = vst.msk [vmem:[%s4 + $0x128] sm:$0xf] %vm699, %v695
    %737 = vst.msk [vmem:[%s4 + $0x130] sm:$0xff] %vm188, %v690
    %738 = vst.msk [vmem:[%s4 + $0x138] sm:$0xf] %vm699, %v695
    %739 = vst.msk [vmem:[%s4 + $0x140] sm:$0xff] %vm188, %v690
    %740 = vst.msk [vmem:[%s4 + $0x148] sm:$0xf] %vm699, %v695
    %741 = vst.msk [vmem:[%s4 + $0x150] sm:$0xff] %vm188, %v690
    %742 = vst.msk [vmem:[%s4 + $0x158] sm:$0xf] %vm699, %v695
    %743 = vst.msk [vmem:[%s4 + $0x160] sm:$0xff] %vm188, %v690
    %744 = vst.msk [vmem:[%s4 + $0x168] sm:$0xf] %vm699, %v695
    %745 = vst.msk [vmem:[%s4 + $0x170] sm:$0xff] %vm188, %v690
    %746 = vst.msk [vmem:[%s4 + $0x178] sm:$0xf] %vm699, %v695
    %747 = vst.msk [vmem:[%s4 + $0x180] sm:$0xff] %vm188, %v690
    %748 = vst.msk [vmem:[%s4 + $0x188] sm:$0xf] %vm699, %v695
    // Predicated region
    $region22: #{tpu_custom_call.1} parent=1 // pred_check
      _
    $region23: #{tpu_custom_call.1} parent=1 // pred_check_branch
      %750 = sbr.rel (0) target = $region25
    $region24: #{tpu_custom_call.1} parent=1 // pred_region
      _
    $region25: #{tpu_custom_call.1} parent=1 // pred_fallthru
      _
    // Predicated region
    $region26: #{tpu_custom_call.1} parent=1 // pred_check
      _
    $region27: #{tpu_custom_call.1} parent=1 // pred_check_branch
      %752 = sbr.rel (0) target = $region29
    $region28: #{tpu_custom_call.1} parent=1 // pred_region
      _
    $region29: #{tpu_custom_call.1} parent=1 // pred_fallthru
      _
    %753 = vsyncpa [#allocation4], 1

</llo_original>
